<compile_context>
chip_gen: v5e
topology: v5e:2x2
jax: 0.10.0
libtpu: 0.0.40
codegen_flags: <defaults>
</compile_context>

<pallas_src>
import functools

import jax
import jax.numpy as jnp
from jax import lax
from jax.experimental import pallas as pl
from jax.experimental.pallas import tpu as pltpu


def _log_sigmoid(x):
    # numerically stable log(sigmoid(x)) = min(x, 0) - log1p(exp(-|x|))
    return jnp.minimum(x, 0.0) - jnp.log1p(jnp.exp(-jnp.abs(x)))


def _skipgram_tile_kernel(valid_count,
                          pos_v_ref, pos_u_ref, neg_v_ref, neg_u_ref,
                          out_ref):
    """One grid step over TB batch columns; embeddings laid out (D, TB).

    out_ref is a lane-dense (1, TB) block of per-column loss contributions
    (padding columns masked to 0); the wrapper does the final scalar reduce.
    """
    tb = out_ref.shape[1]

    # Per-pair dot products: VPU elementwise mul + one vectorized sublane
    # reduce over D for the whole tile -> (1, TB).
    pos_z = jnp.sum(pos_v_ref[...] * pos_u_ref[...], axis=0, keepdims=True)
    neg_z = jnp.sum(neg_v_ref[...] * neg_u_ref[...], axis=0, keepdims=True)

    # One batched EUP pass over the stacked arguments (2, TB).
    z = jnp.concatenate([pos_z, -neg_z], axis=0)
    ls = _log_sigmoid(z)
    col_loss = -jnp.sum(ls, axis=0, keepdims=True)            # (1, TB)

    # Mask the padding columns (batch padded up to a multiple of TB).
    col = pl.program_id(0) * tb + lax.broadcasted_iota(jnp.int32, (1, tb), 1)
    out_ref[...] = jnp.where(col < valid_count, col_loss, 0.0)


@jax.jit
def skipgram_loss(pos_v, pos_u, neg_v, neg_u, v_emb, u_emb):
    """Pallas-backed SkipGram forward (neg_model=True branch). Returns scalar loss."""
    B = pos_v.shape[0]
    _, D = v_emb.shape

    # Tile size along the batch (lane) axis: multiple of 128, capped at 512.
    TB = min(512, ((B + 127) // 128) * 128)
    num_chunks = (B + TB - 1) // TB
    Bp = num_chunks * TB

    def prep(idx):
        idx = idx.astype(jnp.int32).reshape(-1)
        return jnp.pad(idx, (0, Bp - B))  # pad with row 0 (valid), masked in-kernel

    pv_i, pu_i, nv_i, nu_i = prep(pos_v), prep(pos_u), prep(neg_v), prep(neg_u)

    # Pre-gather rows into contiguous slabs (review's "easiest path"), then
    # transpose so batch sits on the lane axis -> lane-dense kernel work.
    pv = jnp.take(v_emb, pv_i, axis=0).T       # (D, Bp)
    pu = jnp.take(u_emb, pu_i, axis=0).T
    nv = jnp.take(v_emb, nv_i, axis=0).T
    nu = jnp.take(u_emb, nu_i, axis=0).T

    row_spec = pl.BlockSpec((D, TB), lambda i: (0, i))
    out_spec = pl.BlockSpec((1, TB), lambda i: (0, i))

    # VMEM budget: 4 inputs x double-buffer x (D, TB) f32 + output blocks.
    vmem_bytes = 4 * 2 * D * TB * 4 + 2 * TB * 4
    vmem_limit = int(min(max(2 * vmem_bytes, 4 * 1024 * 1024), 32 * 1024 * 1024))

    partials = pl.pallas_call(
        functools.partial(_skipgram_tile_kernel, B),
        out_shape=jax.ShapeDtypeStruct((1, Bp), jnp.float32),
        grid_spec=pltpu.PrefetchScalarGridSpec(
            num_scalar_prefetch=0,
            grid=(num_chunks,),
            in_specs=[row_spec, row_spec, row_spec, row_spec],
            out_specs=out_spec,
        ),
        compiler_params=pltpu.CompilerParams(
            # Chunks are independent (no resident accumulator) -> parallel,
            # so v7x's two TensorCores can split the batch.
            dimension_semantics=("parallel",),
            vmem_limit_bytes=vmem_limit,
        ),
    )(pv, pu, nv, nu)

    # Final tiny reduce of the lane-dense partials.
    return jnp.sum(partials)


def skipgram_loss_shared(pos_v, pos_u, neg_v, neg_u, emb):
    """neg_model=False branch: one shared (2V-1, D) table for both sides."""
    return skipgram_loss(pos_v, pos_u, neg_v, neg_u, emb, emb)


def skipgram_loss_ref(pos_v, pos_u, neg_v, neg_u, v_emb, u_emb):
    """Plain-JAX reference matching the PyTorch forward."""
    pv = jnp.take(v_emb, pos_v, axis=0)
    pu = jnp.take(u_emb, pos_u, axis=0)
    nv = jnp.take(v_emb, neg_v, axis=0)
    nu = jnp.take(u_emb, neg_u, axis=0)
    pos_z = jnp.sum(pv * pu, axis=1, keepdims=True)
    neg_z = jnp.sum(nv * nu, axis=1, keepdims=True)
    pos_a = jax.nn.log_sigmoid(pos_z)
    neg_a = jax.nn.log_sigmoid(-neg_z)
    return -(jnp.sum(pos_a) + jnp.sum(neg_a))


if __name__ == "__main__":
    embedding_dim = 128   # lane-dense D (multiple of 128)
    vocab_size = 64
    batch = 8

    key = jax.random.PRNGKey(0)
    k_v, k_u, k_pv, k_pu, k_nv, k_nu = jax.random.split(key, 6)

    # v_embedding: xavier-uniform, as in the module.
    limit = (6.0 / (vocab_size + embedding_dim)) ** 0.5
    v_emb = jax.random.uniform(k_v, (vocab_size, embedding_dim),
                               minval=-limit, maxval=limit, dtype=jnp.float32)
    # The module initializes u_embedding with uniform_(-0, 0) (i.e. zeros);
    # use a small deterministic random init here so the hot path is exercised.
    u_emb = jax.random.uniform(k_u, (vocab_size, embedding_dim),
                               minval=-0.05, maxval=0.05, dtype=jnp.float32)

    pos_v = jax.random.randint(k_pv, (batch,), 0, vocab_size, dtype=jnp.int32)
    pos_u = jax.random.randint(k_pu, (batch,), 0, vocab_size, dtype=jnp.int32)
    neg_v = jax.random.randint(k_nv, (batch,), 0, vocab_size, dtype=jnp.int32)
    neg_u = jax.random.randint(k_nu, (batch,), 0, vocab_size, dtype=jnp.int32)

    loss = skipgram_loss(pos_v, pos_u, neg_v, neg_u, v_emb, u_emb)
    jax.block_until_ready(loss)

    loss_ref = skipgram_loss_ref(pos_v, pos_u, neg_v, neg_u, v_emb, u_emb)
    assert jnp.allclose(loss, loss_ref, atol=1e-5, rtol=1e-5), (loss, loss_ref)

    print("KERNEL_OK")
</pallas_src>

<mosaic_0001>
module attributes {stable_mosaic.version = 11 : i64} {
  func.func @_skipgram_tile_kernel(%arg0: i32, %arg1: memref<128x128xf32, #tpu.memory_space<vmem>>, %arg2: memref<128x128xf32, #tpu.memory_space<vmem>>, %arg3: memref<128x128xf32, #tpu.memory_space<vmem>>, %arg4: memref<128x128xf32, #tpu.memory_space<vmem>>, %arg5: memref<1x128xf32, #tpu.memory_space<vmem>>) attributes {dimension_semantics = [#tpu.dimension_semantics<parallel>], iteration_bounds = array<i64: 1>, scalar_prefetch = 0 : i64, scratch_operands = 0 : i64, tpu.core_type = #tpu.core_type<tc>, window_params = [{transform_indices = @transform_0, window_bounds = array<i64: 128, 128>}, {transform_indices = @transform_1, window_bounds = array<i64: 128, 128>}, {transform_indices = @transform_2, window_bounds = array<i64: 128, 128>}, {transform_indices = @transform_3, window_bounds = array<i64: 128, 128>}, {transform_indices = @transform_4, window_bounds = array<i64: 1, 128>}]} {
    %c0 = arith.constant 0 : index
    %c0_0 = arith.constant 0 : index
    %0 = vector.load %arg1[%c0, %c0_0] : memref<128x128xf32, #tpu.memory_space<vmem>>, vector<128x128xf32>
    %c0_1 = arith.constant 0 : index
    %c0_2 = arith.constant 0 : index
    %1 = vector.load %arg2[%c0_1, %c0_2] : memref<128x128xf32, #tpu.memory_space<vmem>>, vector<128x128xf32>
    %2 = arith.mulf %0, %1 : vector<128x128xf32>
    %cst = arith.constant dense<0.000000e+00> : vector<128xf32>
    %3 = vector.multi_reduction <add>, %2, %cst [0] : vector<128x128xf32> to vector<128xf32>
    %4 = vector.shape_cast %3 : vector<128xf32> to vector<1x128xf32>
    %c0_3 = arith.constant 0 : index
    %c0_4 = arith.constant 0 : index
    %5 = vector.load %arg3[%c0_3, %c0_4] : memref<128x128xf32, #tpu.memory_space<vmem>>, vector<128x128xf32>
    %c0_5 = arith.constant 0 : index
    %c0_6 = arith.constant 0 : index
    %6 = vector.load %arg4[%c0_5, %c0_6] : memref<128x128xf32, #tpu.memory_space<vmem>>, vector<128x128xf32>
    %7 = arith.mulf %5, %6 : vector<128x128xf32>
    %cst_7 = arith.constant dense<0.000000e+00> : vector<128xf32>
    %8 = vector.multi_reduction <add>, %7, %cst_7 [0] : vector<128x128xf32> to vector<128xf32>
    %9 = vector.shape_cast %8 : vector<128xf32> to vector<1x128xf32>
    %cst_8 = arith.constant 0.000000e+00 : f32
    %10 = vector.broadcast %cst_8 : f32 to vector<1x128xf32>
    %11 = arith.subf %10, %9 : vector<1x128xf32>
    %12 = tpu.concatenate %4, %11 in 0 : vector<1x128xf32>, vector<1x128xf32> -> vector<2x128xf32>
    %cst_9 = arith.constant 0.000000e+00 : f32
    %13 = vector.broadcast %cst_9 : f32 to vector<2x128xf32>
    %14 = arith.minimumf %12, %13 : vector<2x128xf32>
    %15 = math.absf %12 : vector<2x128xf32>
    %cst_10 = arith.constant 0.000000e+00 : f32
    %16 = vector.broadcast %cst_10 : f32 to vector<2x128xf32>
    %17 = arith.subf %16, %15 : vector<2x128xf32>
    %18 = math.exp %17 : vector<2x128xf32>
    %19 = math.log1p %18 : vector<2x128xf32>
    %20 = arith.subf %14, %19 : vector<2x128xf32>
    %cst_11 = arith.constant dense<0.000000e+00> : vector<128xf32>
    %21 = vector.multi_reduction <add>, %20, %cst_11 [0] : vector<2x128xf32> to vector<128xf32>
    %22 = vector.shape_cast %21 : vector<128xf32> to vector<1x128xf32>
    %cst_12 = arith.constant 0.000000e+00 : f32
    %23 = vector.broadcast %cst_12 : f32 to vector<1x128xf32>
    %24 = arith.subf %23, %22 : vector<1x128xf32>
    %c128_i32 = arith.constant 128 : i32
    %25 = arith.muli %arg0, %c128_i32 : i32
    %26 = tpu.iota {dimensions = array<i32: 1>} : vector<1x128xi32>
    %27 = vector.broadcast %25 : i32 to vector<1x128xi32>
    %28 = arith.addi %27, %26 : vector<1x128xi32>
    %c8_i32 = arith.constant 8 : i32
    %29 = vector.broadcast %c8_i32 : i32 to vector<1x128xi32>
    %30 = arith.cmpi slt, %28, %29 : vector<1x128xi32>
    %cst_13 = arith.constant 0.000000e+00 : f32
    %31 = vector.broadcast %cst_13 : f32 to vector<1x128xf32>
    %32 = arith.select %30, %24, %31 : vector<1x128xi1>, vector<1x128xf32>
    %c0_14 = arith.constant 0 : index
    %c0_15 = arith.constant 0 : index
    %33 = vector.load %arg5[%c0_14, %c0_15] : memref<1x128xf32, #tpu.memory_space<vmem>>, vector<1x128xf32>
    tpu.vector_store %arg5[%c0_14, %c0_15], %32 {strides = array<i32>} : memref<1x128xf32, #tpu.memory_space<vmem>>, vector<1x128xf32>,
    return
  }
  func.func @transform_0(%arg0: i32) -> (i32, i32) {
    %c0_i32 = arith.constant 0 : i32
    %c0_i32_0 = arith.constant 0 : i32
    return %c0_i32, %arg0 : i32, i32
  }
  func.func @transform_1(%arg0: i32) -> (i32, i32) {
    %c0_i32 = arith.constant 0 : i32
    %c0_i32_0 = arith.constant 0 : i32
    return %c0_i32, %arg0 : i32, i32
  }
  func.func @transform_2(%arg0: i32) -> (i32, i32) {
    %c0_i32 = arith.constant 0 : i32
    %c0_i32_0 = arith.constant 0 : i32
    return %c0_i32, %arg0 : i32, i32
  }
  func.func @transform_3(%arg0: i32) -> (i32, i32) {
    %c0_i32 = arith.constant 0 : i32
    %c0_i32_0 = arith.constant 0 : i32
    return %c0_i32, %arg0 : i32, i32
  }
  func.func @transform_4(%arg0: i32) -> (i32, i32) {
    %c0_i32 = arith.constant 0 : i32
    %c0_i32_0 = arith.constant 0 : i32
    return %c0_i32, %arg0 : i32, i32
  }
}

</mosaic_0001>

<llo_original>
// kernel: skipgram_loss.1
$region0: #{skipgram_loss.1}
  #allocation0 [shape = 'u32[]', space=smem, size = 0x4, offset = 0x4, fixed_abs, tag = 'smem constant byte address 0x4 - core index']
  #allocation1 [shape = 'u32[72,128]{1,0:T(1,128)}', space=vmem, size = 0x9000, scoped, tag = 'internal scratch']
  %s0 = inlined_call_operand.vmem [shape: f32[128,128], index: 0, kind: input, shape index: {}]
  %s1 = inlined_call_operand.vmem [shape: f32[128,128], index: 1, kind: input, shape index: {}]
  %s2 = inlined_call_operand.vmem [shape: f32[128,128], index: 2, kind: input, shape index: {}]
  %s3 = inlined_call_operand.vmem [shape: f32[128,128], index: 3, kind: input, shape index: {}]
  %s4 = inlined_call_operand.vmem [shape: f32[1,128], index: 4, kind: output, shape index: {}]
  %s5 = sld [smem:[#allocation0]]
  $region26: #{skipgram_loss.1} parent=0
    _
  %s7 = ssub.s32 1, %s5
  %s8 = scalar_select 0, %s7, %s5
  // Predicated region
  $region2: #{skipgram_loss.1} parent=0 // pred_check
    _
  $region3: #{skipgram_loss.1} parent=0 // pred_check_branch
    %10 = sbr.rel (0) target = $region5
  $region4: #{skipgram_loss.1} parent=0 // pred_region
    _
  $region5: #{skipgram_loss.1} parent=0 // pred_fallthru
    _
  // Predicated region
  $region6: #{skipgram_loss.1} parent=0 // pred_check
    _
  $region7: #{skipgram_loss.1} parent=0 // pred_check_branch
    %12 = sbr.rel (0) target = $region9
  $region8: #{skipgram_loss.1} parent=0 // pred_region
    _
  $region9: #{skipgram_loss.1} parent=0 // pred_fallthru
    _
  // Predicated region
  $region10: #{skipgram_loss.1} parent=0 // pred_check
    _
  $region11: #{skipgram_loss.1} parent=0 // pred_check_branch
    %14 = sbr.rel (0) target = $region13
  $region12: #{skipgram_loss.1} parent=0 // pred_region
    _
  $region13: #{skipgram_loss.1} parent=0 // pred_fallthru
    _
  // Predicated region
  $region14: #{skipgram_loss.1} parent=0 // pred_check
    _
  $region15: #{skipgram_loss.1} parent=0 // pred_check_branch
    %16 = sbr.rel (0) target = $region17
  $region16: #{skipgram_loss.1} parent=0 // pred_region
    _
  $region17: #{skipgram_loss.1} parent=0 // pred_fallthru
    _
  %v17 = vld [vmem:[%s0] sm:$0xff]
  %v18 = vld [vmem:[%s0 + $0x8] sm:$0xff]
  %v19 = vld [vmem:[%s0 + $0x10] sm:$0xff]
  %v20 = vld [vmem:[%s0 + $0x18] sm:$0xff]
  %v21 = vld [vmem:[%s0 + $0x20] sm:$0xff]
  %v22 = vld [vmem:[%s0 + $0x28] sm:$0xff]
  %v23 = vld [vmem:[%s0 + $0x30] sm:$0xff]
  %v24 = vld [vmem:[%s0 + $0x38] sm:$0xff]
  %v25 = vld [vmem:[%s0 + $0x40] sm:$0xff]
  %v26 = vld [vmem:[%s0 + $0x48] sm:$0xff]
  %v27 = vld [vmem:[%s0 + $0x50] sm:$0xff]
  %v28 = vld [vmem:[%s0 + $0x58] sm:$0xff]
  %v29 = vld [vmem:[%s0 + $0x60] sm:$0xff]
  %v30 = vld [vmem:[%s0 + $0x68] sm:$0xff]
  %v31 = vld [vmem:[%s0 + $0x70] sm:$0xff]
  %v32 = vld [vmem:[%s0 + $0x78] sm:$0xff]
  %v33 = vld [vmem:[%s1] sm:$0xff]
  %v34 = vld [vmem:[%s1 + $0x8] sm:$0xff]
  %v35 = vld [vmem:[%s1 + $0x10] sm:$0xff]
  %v36 = vld [vmem:[%s1 + $0x18] sm:$0xff]
  %v37 = vld [vmem:[%s1 + $0x20] sm:$0xff]
  %v38 = vld [vmem:[%s1 + $0x28] sm:$0xff]
  %v39 = vld [vmem:[%s1 + $0x30] sm:$0xff]
  %v40 = vld [vmem:[%s1 + $0x38] sm:$0xff]
  %v41 = vld [vmem:[%s1 + $0x40] sm:$0xff]
  %v42 = vld [vmem:[%s1 + $0x48] sm:$0xff]
  %v43 = vld [vmem:[%s1 + $0x50] sm:$0xff]
  %v44 = vld [vmem:[%s1 + $0x58] sm:$0xff]
  %v45 = vld [vmem:[%s1 + $0x60] sm:$0xff]
  %v46 = vld [vmem:[%s1 + $0x68] sm:$0xff]
  %v47 = vld [vmem:[%s1 + $0x70] sm:$0xff]
  %v48 = vld [vmem:[%s1 + $0x78] sm:$0xff]
  %v49 = vmul.f32 %v17, %v33
  %v50 = vmul.f32 %v18, %v34
  %v51 = vmul.f32 %v19, %v35
  %v52 = vmul.f32 %v20, %v36
  %v53 = vmul.f32 %v21, %v37
  %v54 = vmul.f32 %v22, %v38
  %v55 = vmul.f32 %v23, %v39
  %v56 = vmul.f32 %v24, %v40
  %v57 = vmul.f32 %v25, %v41
  %v58 = vmul.f32 %v26, %v42
  %v59 = vmul.f32 %v27, %v43
  %v60 = vmul.f32 %v28, %v44
  %v61 = vmul.f32 %v29, %v45
  %v62 = vmul.f32 %v30, %v46
  %v63 = vmul.f32 %v31, %v47
  %v64 = vmul.f32 %v32, %v48
  %v65 = vadd.f32 %v49, %v50
  %v66 = vadd.f32 %v65, %v51
  %v67 = vadd.f32 %v66, %v52
  %v68 = vadd.f32 %v67, %v53
  %v69 = vadd.f32 %v68, %v54
  %v70 = vadd.f32 %v69, %v55
  %v71 = vadd.f32 %v70, %v56
  %v72 = vadd.f32 %v71, %v57
  %v73 = vadd.f32 %v72, %v58
  %v74 = vadd.f32 %v73, %v59
  %v75 = vadd.f32 %v74, %v60
  %v76 = vadd.f32 %v75, %v61
  %v77 = vadd.f32 %v76, %v62
  %v78 = vadd.f32 %v77, %v63
  %v79 = vadd.f32 %v78, %v64
  %v80 = vrot.slane %v79, 4
  %v81 = vadd.f32 %v79, %v80
  %v82 = vrot.slane %v81, 2
  %v83 = vadd.f32 %v81, %v82
  %v84 = vrot.slane %v83, 1
  %v85 = vadd.f32 %v83, %v84
  %v86 = vld [vmem:[%s2] sm:$0xff]
  %v87 = vld [vmem:[%s2 + $0x8] sm:$0xff]
  %v88 = vld [vmem:[%s2 + $0x10] sm:$0xff]
  %v89 = vld [vmem:[%s2 + $0x18] sm:$0xff]
  %v90 = vld [vmem:[%s2 + $0x20] sm:$0xff]
  %v91 = vld [vmem:[%s2 + $0x28] sm:$0xff]
  %v92 = vld [vmem:[%s2 + $0x30] sm:$0xff]
  %v93 = vld [vmem:[%s2 + $0x38] sm:$0xff]
  %v94 = vld [vmem:[%s2 + $0x40] sm:$0xff]
  %v95 = vld [vmem:[%s2 + $0x48] sm:$0xff]
  %v96 = vld [vmem:[%s2 + $0x50] sm:$0xff]
  %v97 = vld [vmem:[%s2 + $0x58] sm:$0xff]
  %v98 = vld [vmem:[%s2 + $0x60] sm:$0xff]
  %v99 = vld [vmem:[%s2 + $0x68] sm:$0xff]
  %v100 = vld [vmem:[%s2 + $0x70] sm:$0xff]
  %v101 = vld [vmem:[%s2 + $0x78] sm:$0xff]
  %v102 = vld [vmem:[%s3] sm:$0xff]
  %v103 = vld [vmem:[%s3 + $0x8] sm:$0xff]
  %v104 = vld [vmem:[%s3 + $0x10] sm:$0xff]
  %v105 = vld [vmem:[%s3 + $0x18] sm:$0xff]
  %v106 = vld [vmem:[%s3 + $0x20] sm:$0xff]
  %v107 = vld [vmem:[%s3 + $0x28] sm:$0xff]
  %v108 = vld [vmem:[%s3 + $0x30] sm:$0xff]
  %v109 = vld [vmem:[%s3 + $0x38] sm:$0xff]
  %v110 = vld [vmem:[%s3 + $0x40] sm:$0xff]
  %v111 = vld [vmem:[%s3 + $0x48] sm:$0xff]
  %v112 = vld [vmem:[%s3 + $0x50] sm:$0xff]
  %v113 = vld [vmem:[%s3 + $0x58] sm:$0xff]
  %v114 = vld [vmem:[%s3 + $0x60] sm:$0xff]
  %v115 = vld [vmem:[%s3 + $0x68] sm:$0xff]
  %v116 = vld [vmem:[%s3 + $0x70] sm:$0xff]
  %v117 = vld [vmem:[%s3 + $0x78] sm:$0xff]
  %v118 = vmul.f32 %v86, %v102
  %v119 = vmul.f32 %v87, %v103
  %v120 = vmul.f32 %v88, %v104
  %v121 = vmul.f32 %v89, %v105
  %v122 = vmul.f32 %v90, %v106
  %v123 = vmul.f32 %v91, %v107
  %v124 = vmul.f32 %v92, %v108
  %v125 = vmul.f32 %v93, %v109
  %v126 = vmul.f32 %v94, %v110
  %v127 = vmul.f32 %v95, %v111
  %v128 = vmul.f32 %v96, %v112
  %v129 = vmul.f32 %v97, %v113
  %v130 = vmul.f32 %v98, %v114
  %v131 = vmul.f32 %v99, %v115
  %v132 = vmul.f32 %v100, %v116
  %v133 = vmul.f32 %v101, %v117
  %v134 = vadd.f32 %v118, %v119
  %v135 = vadd.f32 %v134, %v120
  %v136 = vadd.f32 %v135, %v121
  %v137 = vadd.f32 %v136, %v122
  %v138 = vadd.f32 %v137, %v123
  %v139 = vadd.f32 %v138, %v124
  %v140 = vadd.f32 %v139, %v125
  %v141 = vadd.f32 %v140, %v126
  %v142 = vadd.f32 %v141, %v127
  %v143 = vadd.f32 %v142, %v128
  %v144 = vadd.f32 %v143, %v129
  %v145 = vadd.f32 %v144, %v130
  %v146 = vadd.f32 %v145, %v131
  %v147 = vadd.f32 %v146, %v132
  %v148 = vadd.f32 %v147, %v133
  %v149 = vrot.slane %v148, 4
  %v150 = vadd.f32 %v148, %v149
  %v151 = vrot.slane %v150, 2
  %v152 = vadd.f32 %v150, %v151
  %v153 = vrot.slane %v152, 1
  %v154 = vadd.f32 %v152, %v153
  %v155 = vsub.f32 0.0, %v154
  %vm156 = vcmask 1040384
  %v157 = vsel %vm156, %v85, %v155
  %v158 = vmin.f32 %v157, 0.0
  %v159 = vand.u32 2147483647, %v157
  %v160 = vsub.f32 0.0, %v159
  %v161 = vmul.f32 %v160, 1.442695
  %v162 = vpow.pop %v161
  %v163 = vadd.f32 %v162, 1.0
  %v164 = vlog2.pop %v163
  %v165 = vmul.f32 %v164, 0.6931472
  %v166 = vmul.f32 -0.5, %v162
  %v167 = vadd.f32 %v166, 1.0
  %v168 = vmul.f32 %v167, %v162
  %v169 = vand.u32 2147483647, %v162
  %vm170 = vcmp.lt.f32.partialorder %v169, 0.0004427343
  %v171 = vsel %vm170, %v168, %v165
  %v172 = vsub.f32 %v158, %v171
  %vm173 = vcmask 1041408
  %v174 = vsel %vm173, %v172, 0.0
  %v175 = vrot.slane %v174, 4
  %v176 = vadd.f32 %v174, %v175
  %v177 = vrot.slane %v176, 2
  %v178 = vadd.f32 %v176, %v177
  %v179 = vrot.slane %v178, 1
  %v180 = vadd.f32 %v178, %v179
  %v181 = vsub.f32 0.0, %v180
  %s182 = smul.u32 0, 128
  %v183 = vlaneseq
  %v184 = vand.u32 %v183, 127
  %v185 = vstv %s182
  %v186 = vadd.s32 %v185, %v184
  %vm187 = vcmp.lt.s32.totalorder %v186, 8
  %v188 = vsel %vm187, %v181, 0.0
  %189 = vst [vmem:[%s4] sm:$0x1] %v188
  // Predicated region
  $region18: #{skipgram_loss.1} parent=0 // pred_check
    _
  $region19: #{skipgram_loss.1} parent=0 // pred_check_branch
    %191 = sbr.rel (0) target = $region21
  $region20: #{skipgram_loss.1} parent=0 // pred_region
    _
  $region21: #{skipgram_loss.1} parent=0 // pred_fallthru
    _
  // Predicated region
  $region22: #{skipgram_loss.1} parent=0 // pred_check
    _
  $region23: #{skipgram_loss.1} parent=0 // pred_check_branch
    %193 = sbr.rel (0) target = $region25
  $region24: #{skipgram_loss.1} parent=0 // pred_region
    _
  $region25: #{skipgram_loss.1} parent=0 // pred_fallthru
    _

</llo_original>
